<compile_context>
chip_gen: v5e
topology: v5e:2x2
jax: 0.10.0
libtpu: 0.0.40
codegen_flags: <defaults>
</compile_context>

<pallas_src>
import math

import numpy as np

import jax
import jax.numpy as jnp
from jax.experimental import pallas as pl
from jax.experimental.pallas import tpu as pltpu


# ---------------------------------------------------------------------------
# Fused Conv2d(3x3) + GroupNorm + SiLU kernel
# ---------------------------------------------------------------------------
def _make_conv_block_kernel(B, HW, groups_per_step, cpg, eps, out_dtype):
    inv_n = 1.0 / float(cpg * HW)

    def kernel(p_ref, w_ref, gb_ref, o_ref):
        # p_ref : (K, B*HW)      bf16 im2col patches (+ ones row for the bias)
        # w_ref : (Cb, K)        bf16 flattened conv weight (+ bias column)
        # gb_ref: (Cb, 2)        f32  [gamma, beta] per channel
        # o_ref : (B, Cb, HW)    fused output
        # Conv (bias folded in) as one bf16 MXU matmul, f32 accumulation.
        y = jnp.dot(w_ref[...], p_ref[...],
                    preferred_element_type=jnp.float32)      # (Cb, B*HW) f32

        gamma = gb_ref[:, 0:1]                                # (Cb, 1)
        beta = gb_ref[:, 1:2]                                 # (Cb, 1)

        # GroupNorm + SiLU.  Static loops over (group, batch); every slice is
        # sublane-aligned (multiples of cpg=8) and lane-aligned (multiples of
        # HW=256), so all stores are unmasked and lane-dense.
        for g in range(groups_per_step):
            lo, hi = g * cpg, (g + 1) * cpg
            ga = gamma[lo:hi, :]
            be = beta[lo:hi, :]
            for b in range(B):
                yg = y[lo:hi, b * HW:(b + 1) * HW]            # (cpg, HW)
                # One-pass statistics: sum and sum-of-squares.
                s = jnp.sum(yg)
                ss = jnp.sum(yg * yg)
                mean = s * inv_n
                var = jnp.maximum(ss * inv_n - mean * mean, 0.0)
                z = (yg - mean) * jax.lax.rsqrt(var + eps) * ga + be
                sil = z * jax.nn.sigmoid(z)                   # EUP logistic
                o_ref[b, lo:hi, :] = sil.astype(out_dtype)

    return kernel


def _num_tc_splits():
    """2-way Cout split on v7x (2 TensorCores/chip); 1 elsewhere (single TC)."""
    try:
        kind = jax.devices()[0].device_kind.lower()
    except Exception:
        return 1
    return 2 if "v7" in kind else 1


def conv_block_forward(x, conv_w, conv_b, gn_w, gn_b, *, groups, eps=1e-5,
                       cout_splits=None):
    """
    x      : (B, Cin, H, W)   float32
    conv_w : (Cout, Cin, 3, 3)
    conv_b : (Cout,)
    gn_w   : (Cout,)          GroupNorm weight (gamma)
    gn_b   : (Cout,)          GroupNorm bias   (beta)
    returns (B, Cout, H, W)
    """
    B, Cin, H, W = x.shape
    Cout = conv_w.shape[0]
    assert conv_w.shape == (Cout, Cin, 3, 3)
    assert Cout % groups == 0
    HW = H * W
    K9 = Cin * 9
    K = K9 + 1  # + ones row for the folded bias

    if cout_splits is None:
        cout_splits = _num_tc_splits()
    # GroupNorm groups must not straddle a split; blocks must stay 8-aligned.
    if (groups % cout_splits != 0) or ((Cout // cout_splits) % 8 != 0):
        cout_splits = 1
    Cb = Cout // cout_splits
    groups_per_step = groups // cout_splits
    cpg = Cout // groups

    # im2col (layout plumbing only): patches[ci*9 + kh*3 + kw, b*HW + h*W + w]
    #   = x_padded[b, ci, h + kh, w + kw]; cast to bf16 to halve DMA bytes.
    xp = jnp.pad(x, ((0, 0), (0, 0), (1, 1), (1, 1)))
    patches = jnp.stack(
        [xp[:, :, kh:kh + H, kw:kw + W] for kh in range(3) for kw in range(3)],
        axis=2,
    ).reshape(B, K9, HW).transpose(1, 0, 2).reshape(K9, B * HW)
    ones_row = jnp.ones((1, B * HW), patches.dtype)
    p = jnp.concatenate([patches, ones_row], axis=0).astype(jnp.bfloat16)

    # Flattened weight with the bias as an extra column; (Cout, K) bf16.
    w2 = jnp.concatenate(
        [conv_w.reshape(Cout, K9), conv_b.reshape(Cout, 1)], axis=1
    ).astype(jnp.bfloat16)
    # GroupNorm params packed into a single (Cout, 2) f32 block.
    gb = jnp.stack([gn_w, gn_b], axis=1).astype(jnp.float32)

    kernel = _make_conv_block_kernel(B, HW, groups_per_step, cpg, eps, x.dtype)

    out = pl.pallas_call(
        kernel,
        out_shape=jax.ShapeDtypeStruct((B, Cout, HW), x.dtype),
        grid_spec=pl.GridSpec(
            grid=(cout_splits,),
            in_specs=[
                pl.BlockSpec((K, B * HW), lambda s: (0, 0)),   # patches (full)
                pl.BlockSpec((Cb, K), lambda s: (s, 0)),       # weights
                pl.BlockSpec((Cb, 2), lambda s: (s, 0)),       # gamma/beta
            ],
            out_specs=pl.BlockSpec((B, Cb, HW), lambda s: (0, s, 0)),
        ),
        compiler_params=pltpu.CompilerParams(
            dimension_semantics=("parallel",),
        ),
    )(p, w2, gb)

    return out.reshape(B, Cout, H, W)


# ---------------------------------------------------------------------------
# Pure-JAX reference (independent path: XLA conv + explicit GroupNorm + SiLU)
# ---------------------------------------------------------------------------
def reference_conv_block(x, conv_w, conv_b, gn_w, gn_b, *, groups, eps=1e-5):
    y = jax.lax.conv_general_dilated(
        x, conv_w, window_strides=(1, 1), padding=((1, 1), (1, 1)),
        dimension_numbers=("NCHW", "OIHW", "NCHW"))
    y = y + conv_b[None, :, None, None]
    B, C, H, W = y.shape
    cpg = C // groups
    r = y.reshape(B, groups, cpg * H * W)
    mean = r.mean(axis=2, keepdims=True)
    var = ((r - mean) ** 2).mean(axis=2, keepdims=True)
    rn = (r - mean) / jnp.sqrt(var + eps)
    z = rn.reshape(B, C, H, W) * gn_w[None, :, None, None] + gn_b[None, :, None, None]
    return z * jax.nn.sigmoid(z)


if __name__ == "__main__":
    # Small shapes consistent with the module: batch=2, Cin=4, H=W=16,
    # Cout=32, groups=4.
    B, Cin, H, W = 2, 4, 16, 16
    Cout, groups = 32, 4

    key = jax.random.PRNGKey(0)
    kx, kw, kb, kg, kbe = jax.random.split(key, 5)

    x = jax.random.normal(kx, (B, Cin, H, W), dtype=jnp.float32)
    fan_in = Cin * 3 * 3
    bound = 1.0 / math.sqrt(fan_in)
    conv_w = jax.random.uniform(kw, (Cout, Cin, 3, 3), jnp.float32, -bound, bound)
    conv_b = jax.random.uniform(kb, (Cout,), jnp.float32, -bound, bound)
    gn_w = 1.0 + 0.1 * jax.random.normal(kg, (Cout,), dtype=jnp.float32)
    gn_b = 0.1 * jax.random.normal(kbe, (Cout,), dtype=jnp.float32)

    out = conv_block_forward(x, conv_w, conv_b, gn_w, gn_b, groups=groups)
    out = jax.block_until_ready(out)
    assert out.shape == (B, Cout, H, W)

    ref = reference_conv_block(x, conv_w, conv_b, gn_w, gn_b, groups=groups)
    ref = jax.block_until_ready(ref)
    # Tolerance accounts for bf16 MXU inputs (f32 accumulation); the GroupNorm /
    # SiLU epilogue is exact f32.
    np.testing.assert_allclose(np.asarray(out), np.asarray(ref),
                               rtol=1e-2, atol=1e-2)

    print("KERNEL_OK")
</pallas_src>

<mosaic_0001>
module attributes {stable_mosaic.version = 11 : i64} {
  func.func @kernel(%arg0: i32, %arg1: memref<37x512xbf16, #tpu.memory_space<vmem>>, %arg2: memref<32x37xbf16, #tpu.memory_space<vmem>>, %arg3: memref<32x2xf32, #tpu.memory_space<vmem>>, %arg4: memref<2x32x256xf32, #tpu.memory_space<vmem>>) attributes {dimension_semantics = [#tpu.dimension_semantics<parallel>], iteration_bounds = array<i64: 1>, scalar_prefetch = 0 : i64, scratch_operands = 0 : i64, tpu.core_type = #tpu.core_type<tc>, window_params = [{pipeline_mode = #tpu.pipeline_mode<synchronous>, transform_indices = @transform_0, window_bounds = array<i64: 37, 512>}, {transform_indices = @transform_1, window_bounds = array<i64: 32, 37>}, {transform_indices = @transform_2, window_bounds = array<i64: 32, 2>}, {transform_indices = @transform_3, window_bounds = array<i64: 2, 32, 256>}]} {
    %c0 = arith.constant 0 : index
    %c0_0 = arith.constant 0 : index
    %0 = vector.load %arg2[%c0, %c0_0] : memref<32x37xbf16, #tpu.memory_space<vmem>>, vector<32x37xbf16>
    %c0_1 = arith.constant 0 : index
    %c0_2 = arith.constant 0 : index
    %1 = vector.load %arg1[%c0_1, %c0_2] : memref<37x512xbf16, #tpu.memory_space<vmem>>, vector<37x512xbf16>
    %cst = arith.constant dense<0.000000e+00> : vector<32x512xf32>
    %2 = tpu.matmul %0, %1, %cst {dimension_numbers = #tpu.dot_dimension_numbers<[1], [0], [0], [1], [0, 0, 1, 1], [], []>} : vector<32x37xbf16>, vector<37x512xbf16>, vector<32x512xf32> -> vector<32x512xf32>
    %c0_3 = arith.constant 0 : index
    %c0_4 = arith.constant 0 : index
    %3 = vector.load %arg3[%c0_3, %c0_4] : memref<32x2xf32, #tpu.memory_space<vmem>>, vector<32x1xf32>
    %c0_5 = arith.constant 0 : index
    %c1 = arith.constant 1 : index
    %4 = vector.load %arg3[%c0_5, %c1] : memref<32x2xf32, #tpu.memory_space<vmem>>, vector<32x1xf32>
    %5 = vector.extract_strided_slice %3 {offsets = [0, 0], sizes = [8, 1], strides = [1, 1]} : vector<32x1xf32> to vector<8x1xf32>
    %6 = vector.extract_strided_slice %4 {offsets = [0, 0], sizes = [8, 1], strides = [1, 1]} : vector<32x1xf32> to vector<8x1xf32>
    %7 = vector.extract_strided_slice %2 {offsets = [0, 0], sizes = [8, 256], strides = [1, 1]} : vector<32x512xf32> to vector<8x256xf32>
    %8 = vector.shape_cast %7 : vector<8x256xf32> to vector<1x8x256xf32>
    %cst_6 = arith.constant dense<0.000000e+00> : vector<1xf32>
    %9 = vector.multi_reduction <add>, %8, %cst_6 [1, 2] : vector<1x8x256xf32> to vector<1xf32>
    %10 = vector.shape_cast %9 : vector<1xf32> to vector<1x1x1xf32>
    %11 = vector.extract %10[0, 0, 0] : f32 from vector<1x1x1xf32>
    %12 = arith.mulf %7, %7 : vector<8x256xf32>
    %13 = vector.shape_cast %12 : vector<8x256xf32> to vector<1x8x256xf32>
    %cst_7 = arith.constant dense<0.000000e+00> : vector<1xf32>
    %14 = vector.multi_reduction <add>, %13, %cst_7 [1, 2] : vector<1x8x256xf32> to vector<1xf32>
    %15 = vector.shape_cast %14 : vector<1xf32> to vector<1x1x1xf32>
    %16 = vector.extract %15[0, 0, 0] : f32 from vector<1x1x1xf32>
    %cst_8 = arith.constant 4.8828125E-4 : f32
    %17 = arith.mulf %11, %cst_8 : f32
    %cst_9 = arith.constant 4.8828125E-4 : f32
    %18 = arith.mulf %16, %cst_9 : f32
    %19 = arith.mulf %17, %17 : f32
    %20 = arith.subf %18, %19 : f32
    %cst_10 = arith.constant 0.000000e+00 : f32
    %21 = arith.maximumf %20, %cst_10 : f32
    %22 = vector.broadcast %17 : f32 to vector<8x256xf32>
    %23 = arith.subf %7, %22 : vector<8x256xf32>
    %cst_11 = arith.constant 9.99999974E-6 : f32
    %24 = arith.addf %21, %cst_11 : f32
    %25 = math.rsqrt %24 : f32
    %26 = vector.broadcast %25 : f32 to vector<8x256xf32>
    %27 = arith.mulf %23, %26 : vector<8x256xf32>
    %28 = vector.broadcast %5 : vector<8x1xf32> to vector<8x256xf32>
    %29 = arith.mulf %27, %28 : vector<8x256xf32>
    %30 = vector.broadcast %6 : vector<8x1xf32> to vector<8x256xf32>
    %31 = arith.addf %29, %30 : vector<8x256xf32>
    %32 = arith.negf %31 : vector<8x256xf32>
    %33 = math.exp %32 : vector<8x256xf32>
    %cst_12 = arith.constant 1.000000e+00 : f32
    %34 = vector.broadcast %cst_12 : f32 to vector<8x256xf32>
    %35 = arith.addf %34, %33 : vector<8x256xf32>
    %36 = arith.divf %34, %35 : vector<8x256xf32>
    %37 = arith.mulf %31, %36 : vector<8x256xf32>
    %c0_13 = arith.constant 0 : index
    %c0_14 = arith.constant 0 : index
    %c0_15 = arith.constant 0 : index
    %38 = vector.load %arg4[%c0_13, %c0_14, %c0_15] : memref<2x32x256xf32, #tpu.memory_space<vmem>>, vector<1x8x256xf32>
    %39 = vector.shape_cast %38 : vector<1x8x256xf32> to vector<8x256xf32>
    %40 = vector.shape_cast %37 : vector<8x256xf32> to vector<1x8x256xf32>
    tpu.vector_store %arg4[%c0_13, %c0_14, %c0_15], %40 {strides = array<i32>} : memref<2x32x256xf32, #tpu.memory_space<vmem>>, vector<1x8x256xf32>,
    %41 = vector.extract_strided_slice %2 {offsets = [0, 256], sizes = [8, 256], strides = [1, 1]} : vector<32x512xf32> to vector<8x256xf32>
    %42 = vector.shape_cast %41 : vector<8x256xf32> to vector<1x8x256xf32>
    %cst_16 = arith.constant dense<0.000000e+00> : vector<1xf32>
    %43 = vector.multi_reduction <add>, %42, %cst_16 [1, 2] : vector<1x8x256xf32> to vector<1xf32>
    %44 = vector.shape_cast %43 : vector<1xf32> to vector<1x1x1xf32>
    %45 = vector.extract %44[0, 0, 0] : f32 from vector<1x1x1xf32>
    %46 = arith.mulf %41, %41 : vector<8x256xf32>
    %47 = vector.shape_cast %46 : vector<8x256xf32> to vector<1x8x256xf32>
    %cst_17 = arith.constant dense<0.000000e+00> : vector<1xf32>
    %48 = vector.multi_reduction <add>, %47, %cst_17 [1, 2] : vector<1x8x256xf32> to vector<1xf32>
    %49 = vector.shape_cast %48 : vector<1xf32> to vector<1x1x1xf32>
    %50 = vector.extract %49[0, 0, 0] : f32 from vector<1x1x1xf32>
    %cst_18 = arith.constant 4.8828125E-4 : f32
    %51 = arith.mulf %45, %cst_18 : f32
    %cst_19 = arith.constant 4.8828125E-4 : f32
    %52 = arith.mulf %50, %cst_19 : f32
    %53 = arith.mulf %51, %51 : f32
    %54 = arith.subf %52, %53 : f32
    %cst_20 = arith.constant 0.000000e+00 : f32
    %55 = arith.maximumf %54, %cst_20 : f32
    %56 = vector.broadcast %51 : f32 to vector<8x256xf32>
    %57 = arith.subf %41, %56 : vector<8x256xf32>
    %cst_21 = arith.constant 9.99999974E-6 : f32
    %58 = arith.addf %55, %cst_21 : f32
    %59 = math.rsqrt %58 : f32
    %60 = vector.broadcast %59 : f32 to vector<8x256xf32>
    %61 = arith.mulf %57, %60 : vector<8x256xf32>
    %62 = vector.broadcast %5 : vector<8x1xf32> to vector<8x256xf32>
    %63 = arith.mulf %61, %62 : vector<8x256xf32>
    %64 = vector.broadcast %6 : vector<8x1xf32> to vector<8x256xf32>
    %65 = arith.addf %63, %64 : vector<8x256xf32>
    %66 = arith.negf %65 : vector<8x256xf32>
    %67 = math.exp %66 : vector<8x256xf32>
    %cst_22 = arith.constant 1.000000e+00 : f32
    %68 = vector.broadcast %cst_22 : f32 to vector<8x256xf32>
    %69 = arith.addf %68, %67 : vector<8x256xf32>
    %70 = arith.divf %68, %69 : vector<8x256xf32>
    %71 = arith.mulf %65, %70 : vector<8x256xf32>
    %c1_23 = arith.constant 1 : index
    %c0_24 = arith.constant 0 : index
    %c0_25 = arith.constant 0 : index
    %72 = vector.load %arg4[%c1_23, %c0_24, %c0_25] : memref<2x32x256xf32, #tpu.memory_space<vmem>>, vector<1x8x256xf32>
    %73 = vector.shape_cast %72 : vector<1x8x256xf32> to vector<8x256xf32>
    %74 = vector.shape_cast %71 : vector<8x256xf32> to vector<1x8x256xf32>
    tpu.vector_store %arg4[%c1_23, %c0_24, %c0_25], %74 {strides = array<i32>} : memref<2x32x256xf32, #tpu.memory_space<vmem>>, vector<1x8x256xf32>,
    %75 = vector.extract_strided_slice %3 {offsets = [8, 0], sizes = [8, 1], strides = [1, 1]} : vector<32x1xf32> to vector<8x1xf32>
    %76 = vector.extract_strided_slice %4 {offsets = [8, 0], sizes = [8, 1], strides = [1, 1]} : vector<32x1xf32> to vector<8x1xf32>
    %77 = vector.extract_strided_slice %2 {offsets = [8, 0], sizes = [8, 256], strides = [1, 1]} : vector<32x512xf32> to vector<8x256xf32>
    %78 = vector.shape_cast %77 : vector<8x256xf32> to vector<1x8x256xf32>
    %cst_26 = arith.constant dense<0.000000e+00> : vector<1xf32>
    %79 = vector.multi_reduction <add>, %78, %cst_26 [1, 2] : vector<1x8x256xf32> to vector<1xf32>
    %80 = vector.shape_cast %79 : vector<1xf32> to vector<1x1x1xf32>
    %81 = vector.extract %80[0, 0, 0] : f32 from vector<1x1x1xf32>
    %82 = arith.mulf %77, %77 : vector<8x256xf32>
    %83 = vector.shape_cast %82 : vector<8x256xf32> to vector<1x8x256xf32>
    %cst_27 = arith.constant dense<0.000000e+00> : vector<1xf32>
    %84 = vector.multi_reduction <add>, %83, %cst_27 [1, 2] : vector<1x8x256xf32> to vector<1xf32>
    %85 = vector.shape_cast %84 : vector<1xf32> to vector<1x1x1xf32>
    %86 = vector.extract %85[0, 0, 0] : f32 from vector<1x1x1xf32>
    %cst_28 = arith.constant 4.8828125E-4 : f32
    %87 = arith.mulf %81, %cst_28 : f32
    %cst_29 = arith.constant 4.8828125E-4 : f32
    %88 = arith.mulf %86, %cst_29 : f32
    %89 = arith.mulf %87, %87 : f32
    %90 = arith.subf %88, %89 : f32
    %cst_30 = arith.constant 0.000000e+00 : f32
    %91 = arith.maximumf %90, %cst_30 : f32
    %92 = vector.broadcast %87 : f32 to vector<8x256xf32>
    %93 = arith.subf %77, %92 : vector<8x256xf32>
    %cst_31 = arith.constant 9.99999974E-6 : f32
    %94 = arith.addf %91, %cst_31 : f32
    %95 = math.rsqrt %94 : f32
    %96 = vector.broadcast %95 : f32 to vector<8x256xf32>
    %97 = arith.mulf %93, %96 : vector<8x256xf32>
    %98 = vector.broadcast %75 : vector<8x1xf32> to vector<8x256xf32>
    %99 = arith.mulf %97, %98 : vector<8x256xf32>
    %100 = vector.broadcast %76 : vector<8x1xf32> to vector<8x256xf32>
    %101 = arith.addf %99, %100 : vector<8x256xf32>
    %102 = arith.negf %101 : vector<8x256xf32>
    %103 = math.exp %102 : vector<8x256xf32>
    %cst_32 = arith.constant 1.000000e+00 : f32
    %104 = vector.broadcast %cst_32 : f32 to vector<8x256xf32>
    %105 = arith.addf %104, %103 : vector<8x256xf32>
    %106 = arith.divf %104, %105 : vector<8x256xf32>
    %107 = arith.mulf %101, %106 : vector<8x256xf32>
    %c0_33 = arith.constant 0 : index
    %c8 = arith.constant 8 : index
    %c0_34 = arith.constant 0 : index
    %108 = vector.load %arg4[%c0_33, %c8, %c0_34] : memref<2x32x256xf32, #tpu.memory_space<vmem>>, vector<1x8x256xf32>
    %109 = vector.shape_cast %108 : vector<1x8x256xf32> to vector<8x256xf32>
    %110 = vector.shape_cast %107 : vector<8x256xf32> to vector<1x8x256xf32>
    tpu.vector_store %arg4[%c0_33, %c8, %c0_34], %110 {strides = array<i32>} : memref<2x32x256xf32, #tpu.memory_space<vmem>>, vector<1x8x256xf32>,
    %111 = vector.extract_strided_slice %2 {offsets = [8, 256], sizes = [8, 256], strides = [1, 1]} : vector<32x512xf32> to vector<8x256xf32>
    %112 = vector.shape_cast %111 : vector<8x256xf32> to vector<1x8x256xf32>
    %cst_35 = arith.constant dense<0.000000e+00> : vector<1xf32>
    %113 = vector.multi_reduction <add>, %112, %cst_35 [1, 2] : vector<1x8x256xf32> to vector<1xf32>
    %114 = vector.shape_cast %113 : vector<1xf32> to vector<1x1x1xf32>
    %115 = vector.extract %114[0, 0, 0] : f32 from vector<1x1x1xf32>
    %116 = arith.mulf %111, %111 : vector<8x256xf32>
    %117 = vector.shape_cast %116 : vector<8x256xf32> to vector<1x8x256xf32>
    %cst_36 = arith.constant dense<0.000000e+00> : vector<1xf32>
    %118 = vector.multi_reduction <add>, %117, %cst_36 [1, 2] : vector<1x8x256xf32> to vector<1xf32>
    %119 = vector.shape_cast %118 : vector<1xf32> to vector<1x1x1xf32>
    %120 = vector.extract %119[0, 0, 0] : f32 from vector<1x1x1xf32>
    %cst_37 = arith.constant 4.8828125E-4 : f32
    %121 = arith.mulf %115, %cst_37 : f32
    %cst_38 = arith.constant 4.8828125E-4 : f32
    %122 = arith.mulf %120, %cst_38 : f32
    %123 = arith.mulf %121, %121 : f32
    %124 = arith.subf %122, %123 : f32
    %cst_39 = arith.constant 0.000000e+00 : f32
    %125 = arith.maximumf %124, %cst_39 : f32
    %126 = vector.broadcast %121 : f32 to vector<8x256xf32>
    %127 = arith.subf %111, %126 : vector<8x256xf32>
    %cst_40 = arith.constant 9.99999974E-6 : f32
    %128 = arith.addf %125, %cst_40 : f32
    %129 = math.rsqrt %128 : f32
    %130 = vector.broadcast %129 : f32 to vector<8x256xf32>
    %131 = arith.mulf %127, %130 : vector<8x256xf32>
    %132 = vector.broadcast %75 : vector<8x1xf32> to vector<8x256xf32>
    %133 = arith.mulf %131, %132 : vector<8x256xf32>
    %134 = vector.broadcast %76 : vector<8x1xf32> to vector<8x256xf32>
    %135 = arith.addf %133, %134 : vector<8x256xf32>
    %136 = arith.negf %135 : vector<8x256xf32>
    %137 = math.exp %136 : vector<8x256xf32>
    %cst_41 = arith.constant 1.000000e+00 : f32
    %138 = vector.broadcast %cst_41 : f32 to vector<8x256xf32>
    %139 = arith.addf %138, %137 : vector<8x256xf32>
    %140 = arith.divf %138, %139 : vector<8x256xf32>
    %141 = arith.mulf %135, %140 : vector<8x256xf32>
    %c1_42 = arith.constant 1 : index
    %c8_43 = arith.constant 8 : index
    %c0_44 = arith.constant 0 : index
    %142 = vector.load %arg4[%c1_42, %c8_43, %c0_44] : memref<2x32x256xf32, #tpu.memory_space<vmem>>, vector<1x8x256xf32>
    %143 = vector.shape_cast %142 : vector<1x8x256xf32> to vector<8x256xf32>
    %144 = vector.shape_cast %141 : vector<8x256xf32> to vector<1x8x256xf32>
    tpu.vector_store %arg4[%c1_42, %c8_43, %c0_44], %144 {strides = array<i32>} : memref<2x32x256xf32, #tpu.memory_space<vmem>>, vector<1x8x256xf32>,
    %145 = vector.extract_strided_slice %3 {offsets = [16, 0], sizes = [8, 1], strides = [1, 1]} : vector<32x1xf32> to vector<8x1xf32>
    %146 = vector.extract_strided_slice %4 {offsets = [16, 0], sizes = [8, 1], strides = [1, 1]} : vector<32x1xf32> to vector<8x1xf32>
    %147 = vector.extract_strided_slice %2 {offsets = [16, 0], sizes = [8, 256], strides = [1, 1]} : vector<32x512xf32> to vector<8x256xf32>
    %148 = vector.shape_cast %147 : vector<8x256xf32> to vector<1x8x256xf32>
    %cst_45 = arith.constant dense<0.000000e+00> : vector<1xf32>
    %149 = vector.multi_reduction <add>, %148, %cst_45 [1, 2] : vector<1x8x256xf32> to vector<1xf32>
    %150 = vector.shape_cast %149 : vector<1xf32> to vector<1x1x1xf32>
    %151 = vector.extract %150[0, 0, 0] : f32 from vector<1x1x1xf32>
    %152 = arith.mulf %147, %147 : vector<8x256xf32>
    %153 = vector.shape_cast %152 : vector<8x256xf32> to vector<1x8x256xf32>
    %cst_46 = arith.constant dense<0.000000e+00> : vector<1xf32>
    %154 = vector.multi_reduction <add>, %153, %cst_46 [1, 2] : vector<1x8x256xf32> to vector<1xf32>
    %155 = vector.shape_cast %154 : vector<1xf32> to vector<1x1x1xf32>
    %156 = vector.extract %155[0, 0, 0] : f32 from vector<1x1x1xf32>
    %cst_47 = arith.constant 4.8828125E-4 : f32
    %157 = arith.mulf %151, %cst_47 : f32
    %cst_48 = arith.constant 4.8828125E-4 : f32
    %158 = arith.mulf %156, %cst_48 : f32
    %159 = arith.mulf %157, %157 : f32
    %160 = arith.subf %158, %159 : f32
    %cst_49 = arith.constant 0.000000e+00 : f32
    %161 = arith.maximumf %160, %cst_49 : f32
    %162 = vector.broadcast %157 : f32 to vector<8x256xf32>
    %163 = arith.subf %147, %162 : vector<8x256xf32>
    %cst_50 = arith.constant 9.99999974E-6 : f32
    %164 = arith.addf %161, %cst_50 : f32
    %165 = math.rsqrt %164 : f32
    %166 = vector.broadcast %165 : f32 to vector<8x256xf32>
    %167 = arith.mulf %163, %166 : vector<8x256xf32>
    %168 = vector.broadcast %145 : vector<8x1xf32> to vector<8x256xf32>
    %169 = arith.mulf %167, %168 : vector<8x256xf32>
    %170 = vector.broadcast %146 : vector<8x1xf32> to vector<8x256xf32>
    %171 = arith.addf %169, %170 : vector<8x256xf32>
    %172 = arith.negf %171 : vector<8x256xf32>
    %173 = math.exp %172 : vector<8x256xf32>
    %cst_51 = arith.constant 1.000000e+00 : f32
    %174 = vector.broadcast %cst_51 : f32 to vector<8x256xf32>
    %175 = arith.addf %174, %173 : vector<8x256xf32>
    %176 = arith.divf %174, %175 : vector<8x256xf32>
    %177 = arith.mulf %171, %176 : vector<8x256xf32>
    %c0_52 = arith.constant 0 : index
    %c16 = arith.constant 16 : index
    %c0_53 = arith.constant 0 : index
    %178 = vector.load %arg4[%c0_52, %c16, %c0_53] : memref<2x32x256xf32, #tpu.memory_space<vmem>>, vector<1x8x256xf32>
    %179 = vector.shape_cast %178 : vector<1x8x256xf32> to vector<8x256xf32>
    %180 = vector.shape_cast %177 : vector<8x256xf32> to vector<1x8x256xf32>
    tpu.vector_store %arg4[%c0_52, %c16, %c0_53], %180 {strides = array<i32>} : memref<2x32x256xf32, #tpu.memory_space<vmem>>, vector<1x8x256xf32>,
    %181 = vector.extract_strided_slice %2 {offsets = [16, 256], sizes = [8, 256], strides = [1, 1]} : vector<32x512xf32> to vector<8x256xf32>
    %182 = vector.shape_cast %181 : vector<8x256xf32> to vector<1x8x256xf32>
    %cst_54 = arith.constant dense<0.000000e+00> : vector<1xf32>
    %183 = vector.multi_reduction <add>, %182, %cst_54 [1, 2] : vector<1x8x256xf32> to vector<1xf32>
    %184 = vector.shape_cast %183 : vector<1xf32> to vector<1x1x1xf32>
    %185 = vector.extract %184[0, 0, 0] : f32 from vector<1x1x1xf32>
    %186 = arith.mulf %181, %181 : vector<8x256xf32>
    %187 = vector.shape_cast %186 : vector<8x256xf32> to vector<1x8x256xf32>
    %cst_55 = arith.constant dense<0.000000e+00> : vector<1xf32>
    %188 = vector.multi_reduction <add>, %187, %cst_55 [1, 2] : vector<1x8x256xf32> to vector<1xf32>
    %189 = vector.shape_cast %188 : vector<1xf32> to vector<1x1x1xf32>
    %190 = vector.extract %189[0, 0, 0] : f32 from vector<1x1x1xf32>
    %cst_56 = arith.constant 4.8828125E-4 : f32
    %191 = arith.mulf %185, %cst_56 : f32
    %cst_57 = arith.constant 4.8828125E-4 : f32
    %192 = arith.mulf %190, %cst_57 : f32
    %193 = arith.mulf %191, %191 : f32
    %194 = arith.subf %192, %193 : f32
    %cst_58 = arith.constant 0.000000e+00 : f32
    %195 = arith.maximumf %194, %cst_58 : f32
    %196 = vector.broadcast %191 : f32 to vector<8x256xf32>
    %197 = arith.subf %181, %196 : vector<8x256xf32>
    %cst_59 = arith.constant 9.99999974E-6 : f32
    %198 = arith.addf %195, %cst_59 : f32
    %199 = math.rsqrt %198 : f32
    %200 = vector.broadcast %199 : f32 to vector<8x256xf32>
    %201 = arith.mulf %197, %200 : vector<8x256xf32>
    %202 = vector.broadcast %145 : vector<8x1xf32> to vector<8x256xf32>
    %203 = arith.mulf %201, %202 : vector<8x256xf32>
    %204 = vector.broadcast %146 : vector<8x1xf32> to vector<8x256xf32>
    %205 = arith.addf %203, %204 : vector<8x256xf32>
    %206 = arith.negf %205 : vector<8x256xf32>
    %207 = math.exp %206 : vector<8x256xf32>
    %cst_60 = arith.constant 1.000000e+00 : f32
    %208 = vector.broadcast %cst_60 : f32 to vector<8x256xf32>
    %209 = arith.addf %208, %207 : vector<8x256xf32>
    %210 = arith.divf %208, %209 : vector<8x256xf32>
    %211 = arith.mulf %205, %210 : vector<8x256xf32>
    %c1_61 = arith.constant 1 : index
    %c16_62 = arith.constant 16 : index
    %c0_63 = arith.constant 0 : index
    %212 = vector.load %arg4[%c1_61, %c16_62, %c0_63] : memref<2x32x256xf32, #tpu.memory_space<vmem>>, vector<1x8x256xf32>
    %213 = vector.shape_cast %212 : vector<1x8x256xf32> to vector<8x256xf32>
    %214 = vector.shape_cast %211 : vector<8x256xf32> to vector<1x8x256xf32>
    tpu.vector_store %arg4[%c1_61, %c16_62, %c0_63], %214 {strides = array<i32>} : memref<2x32x256xf32, #tpu.memory_space<vmem>>, vector<1x8x256xf32>,
    %215 = vector.extract_strided_slice %3 {offsets = [24, 0], sizes = [8, 1], strides = [1, 1]} : vector<32x1xf32> to vector<8x1xf32>
    %216 = vector.extract_strided_slice %4 {offsets = [24, 0], sizes = [8, 1], strides = [1, 1]} : vector<32x1xf32> to vector<8x1xf32>
    %217 = vector.extract_strided_slice %2 {offsets = [24, 0], sizes = [8, 256], strides = [1, 1]} : vector<32x512xf32> to vector<8x256xf32>
    %218 = vector.shape_cast %217 : vector<8x256xf32> to vector<1x8x256xf32>
    %cst_64 = arith.constant dense<0.000000e+00> : vector<1xf32>
    %219 = vector.multi_reduction <add>, %218, %cst_64 [1, 2] : vector<1x8x256xf32> to vector<1xf32>
    %220 = vector.shape_cast %219 : vector<1xf32> to vector<1x1x1xf32>
    %221 = vector.extract %220[0, 0, 0] : f32 from vector<1x1x1xf32>
    %222 = arith.mulf %217, %217 : vector<8x256xf32>
    %223 = vector.shape_cast %222 : vector<8x256xf32> to vector<1x8x256xf32>
    %cst_65 = arith.constant dense<0.000000e+00> : vector<1xf32>
    %224 = vector.multi_reduction <add>, %223, %cst_65 [1, 2] : vector<1x8x256xf32> to vector<1xf32>
    %225 = vector.shape_cast %224 : vector<1xf32> to vector<1x1x1xf32>
    %226 = vector.extract %225[0, 0, 0] : f32 from vector<1x1x1xf32>
    %cst_66 = arith.constant 4.8828125E-4 : f32
    %227 = arith.mulf %221, %cst_66 : f32
    %cst_67 = arith.constant 4.8828125E-4 : f32
    %228 = arith.mulf %226, %cst_67 : f32
    %229 = arith.mulf %227, %227 : f32
    %230 = arith.subf %228, %229 : f32
    %cst_68 = arith.constant 0.000000e+00 : f32
    %231 = arith.maximumf %230, %cst_68 : f32
    %232 = vector.broadcast %227 : f32 to vector<8x256xf32>
    %233 = arith.subf %217, %232 : vector<8x256xf32>
    %cst_69 = arith.constant 9.99999974E-6 : f32
    %234 = arith.addf %231, %cst_69 : f32
    %235 = math.rsqrt %234 : f32
    %236 = vector.broadcast %235 : f32 to vector<8x256xf32>
    %237 = arith.mulf %233, %236 : vector<8x256xf32>
    %238 = vector.broadcast %215 : vector<8x1xf32> to vector<8x256xf32>
    %239 = arith.mulf %237, %238 : vector<8x256xf32>
    %240 = vector.broadcast %216 : vector<8x1xf32> to vector<8x256xf32>
    %241 = arith.addf %239, %240 : vector<8x256xf32>
    %242 = arith.negf %241 : vector<8x256xf32>
    %243 = math.exp %242 : vector<8x256xf32>
    %cst_70 = arith.constant 1.000000e+00 : f32
    %244 = vector.broadcast %cst_70 : f32 to vector<8x256xf32>
    %245 = arith.addf %244, %243 : vector<8x256xf32>
    %246 = arith.divf %244, %245 : vector<8x256xf32>
    %247 = arith.mulf %241, %246 : vector<8x256xf32>
    %c0_71 = arith.constant 0 : index
    %c24 = arith.constant 24 : index
    %c0_72 = arith.constant 0 : index
    %248 = vector.load %arg4[%c0_71, %c24, %c0_72] : memref<2x32x256xf32, #tpu.memory_space<vmem>>, vector<1x8x256xf32>
    %249 = vector.shape_cast %248 : vector<1x8x256xf32> to vector<8x256xf32>
    %250 = vector.shape_cast %247 : vector<8x256xf32> to vector<1x8x256xf32>
    tpu.vector_store %arg4[%c0_71, %c24, %c0_72], %250 {strides = array<i32>} : memref<2x32x256xf32, #tpu.memory_space<vmem>>, vector<1x8x256xf32>,
    %251 = vector.extract_strided_slice %2 {offsets = [24, 256], sizes = [8, 256], strides = [1, 1]} : vector<32x512xf32> to vector<8x256xf32>
    %252 = vector.shape_cast %251 : vector<8x256xf32> to vector<1x8x256xf32>
    %cst_73 = arith.constant dense<0.000000e+00> : vector<1xf32>
    %253 = vector.multi_reduction <add>, %252, %cst_73 [1, 2] : vector<1x8x256xf32> to vector<1xf32>
    %254 = vector.shape_cast %253 : vector<1xf32> to vector<1x1x1xf32>
    %255 = vector.extract %254[0, 0, 0] : f32 from vector<1x1x1xf32>
    %256 = arith.mulf %251, %251 : vector<8x256xf32>
    %257 = vector.shape_cast %256 : vector<8x256xf32> to vector<1x8x256xf32>
    %cst_74 = arith.constant dense<0.000000e+00> : vector<1xf32>
    %258 = vector.multi_reduction <add>, %257, %cst_74 [1, 2] : vector<1x8x256xf32> to vector<1xf32>
    %259 = vector.shape_cast %258 : vector<1xf32> to vector<1x1x1xf32>
    %260 = vector.extract %259[0, 0, 0] : f32 from vector<1x1x1xf32>
    %cst_75 = arith.constant 4.8828125E-4 : f32
    %261 = arith.mulf %255, %cst_75 : f32
    %cst_76 = arith.constant 4.8828125E-4 : f32
    %262 = arith.mulf %260, %cst_76 : f32
    %263 = arith.mulf %261, %261 : f32
    %264 = arith.subf %262, %263 : f32
    %cst_77 = arith.constant 0.000000e+00 : f32
    %265 = arith.maximumf %264, %cst_77 : f32
    %266 = vector.broadcast %261 : f32 to vector<8x256xf32>
    %267 = arith.subf %251, %266 : vector<8x256xf32>
    %cst_78 = arith.constant 9.99999974E-6 : f32
    %268 = arith.addf %265, %cst_78 : f32
    %269 = math.rsqrt %268 : f32
    %270 = vector.broadcast %269 : f32 to vector<8x256xf32>
    %271 = arith.mulf %267, %270 : vector<8x256xf32>
    %272 = vector.broadcast %215 : vector<8x1xf32> to vector<8x256xf32>
    %273 = arith.mulf %271, %272 : vector<8x256xf32>
    %274 = vector.broadcast %216 : vector<8x1xf32> to vector<8x256xf32>
    %275 = arith.addf %273, %274 : vector<8x256xf32>
    %276 = arith.negf %275 : vector<8x256xf32>
    %277 = math.exp %276 : vector<8x256xf32>
    %cst_79 = arith.constant 1.000000e+00 : f32
    %278 = vector.broadcast %cst_79 : f32 to vector<8x256xf32>
    %279 = arith.addf %278, %277 : vector<8x256xf32>
    %280 = arith.divf %278, %279 : vector<8x256xf32>
    %281 = arith.mulf %275, %280 : vector<8x256xf32>
    %c1_80 = arith.constant 1 : index
    %c24_81 = arith.constant 24 : index
    %c0_82 = arith.constant 0 : index
    %282 = vector.load %arg4[%c1_80, %c24_81, %c0_82] : memref<2x32x256xf32, #tpu.memory_space<vmem>>, vector<1x8x256xf32>
    %283 = vector.shape_cast %282 : vector<1x8x256xf32> to vector<8x256xf32>
    %284 = vector.shape_cast %281 : vector<8x256xf32> to vector<1x8x256xf32>
    tpu.vector_store %arg4[%c1_80, %c24_81, %c0_82], %284 {strides = array<i32>} : memref<2x32x256xf32, #tpu.memory_space<vmem>>, vector<1x8x256xf32>,
    return
  }
  func.func @transform_0(%arg0: i32) -> (i32, i32) {
    %c0_i32 = arith.constant 0 : i32
    %c0_i32_0 = arith.constant 0 : i32
    %c0_i32_1 = arith.constant 0 : i32
    return %c0_i32, %c0_i32_0 : i32, i32
  }
  func.func @transform_1(%arg0: i32) -> (i32, i32) {
    %c0_i32 = arith.constant 0 : i32
    %c0_i32_0 = arith.constant 0 : i32
    return %arg0, %c0_i32 : i32, i32
  }
  func.func @transform_2(%arg0: i32) -> (i32, i32) {
    %c0_i32 = arith.constant 0 : i32
    %c0_i32_0 = arith.constant 0 : i32
    return %arg0, %c0_i32 : i32, i32
  }
  func.func @transform_3(%arg0: i32) -> (i32, i32, i32) {
    %c0_i32 = arith.constant 0 : i32
    %c0_i32_0 = arith.constant 0 : i32
    %c0_i32_1 = arith.constant 0 : i32
    return %c0_i32, %arg0, %c0_i32_0 : i32, i32, i32
  }
}

</mosaic_0001>

<llo_original>
// kernel: tpu_custom_call.1
$region0: #{tpu_custom_call.1}
  #allocation0 [shape = 'u32[]', space=smem, size = 0x4, offset = 0x4, fixed_abs, tag = 'smem constant byte address 0x4 - core index']
  #allocation1 [shape = 'u32[72,128]{1,0:T(1,128)}', space=vmem, size = 0x9000, scoped, tag = 'internal scratch']
  %s0 = inlined_call_operand.hbm [shape: bf16[37,512], index: 0, kind: input, shape index: {}]
  %s1 = inlined_call_operand.vmem [shape: bf16[32,37], index: 1, kind: input, shape index: {}]
  %s2 = inlined_call_operand.vmem [shape: f32[32,2], index: 2, kind: input, shape index: {}]
  %s3 = inlined_call_operand.hbm [shape: f32[2,32,256], index: 3, kind: output, shape index: {}]
  %s4 = sld [smem:[#allocation0]]
  $region26: #{tpu_custom_call.1} parent=0
    _
  %s6 = ssub.s32 1, %s4
  %s7 = scalar_select 0, %s6, %s4
  $region1: #{tpu_custom_call.1} parent=0
    #allocation2 [shape = 'u8[40960]{0}', space=vmem, size = 0xa000, scoped, tag = 'input window, operand 0, single buffered']
    #allocation3 [shape = 's32[1]{0}', space=sflag, size = 0x4, scoped, tag = 'scoped memory for tpu_custom_call.1']
    #allocation4 [shape = 's32[1]{0}', space=sflag, size = 0x4, scoped, tag = 'scoped memory for tpu_custom_call.1']
    #allocation5 [shape = 'u8[65536]{0}', space=vmem, size = 0x10000, scoped, tag = 'output window, operand 0, single buffered']
    %8 = vsyncpa [#allocation3], 0
    %9 = vsyncpa [#allocation4], 0
    // Predicated region
    $region2: #{tpu_custom_call.1} parent=1 // pred_check
      _
    $region3: #{tpu_custom_call.1} parent=1 // pred_check_branch
      %11 = sbr.rel (0) target = $region5
    $region4: #{tpu_custom_call.1} parent=1 // pred_region
      %13 = vsyncadd [#allocation3], 0
      %s14 = sshll.u32 %s0, 4
      %s15 = int_to_ptr.hbm [resolvable:$true] %s14
      %s16 = sshll.u32 [#allocation2], 4
      %s17 = int_to_ptr.vmem [resolvable:$true] %s16
      %22 = dma.hbm_to_vmem [thread:$0]  %s15, 1280, %s17, [#allocation3], 256, 256, 16
    $region5: #{tpu_custom_call.1} parent=1 // pred_fallthru
      _
    // Predicated region
    $region6: #{tpu_custom_call.1} parent=1 // pred_check
      _
    $region7: #{tpu_custom_call.1} parent=1 // pred_check_branch
      %24 = sbr.rel (0) target = $region9
    $region8: #{tpu_custom_call.1} parent=1 // pred_region
      _
    $region9: #{tpu_custom_call.1} parent=1 // pred_fallthru
      _
    // Predicated region
    $region10: #{tpu_custom_call.1} parent=1 // pred_check
      _
    $region11: #{tpu_custom_call.1} parent=1 // pred_check_branch
      %26 = sbr.rel (0) target = $region13
    $region12: #{tpu_custom_call.1} parent=1 // pred_region
      _
    $region13: #{tpu_custom_call.1} parent=1 // pred_fallthru
      _
    // Predicated region
    $region14: #{tpu_custom_call.1} parent=1 // pred_check
      _
    $region15: #{tpu_custom_call.1} parent=1 // pred_check_branch
      %28 = sbr.rel (0) target = $region17
    $region16: #{tpu_custom_call.1} parent=1 // pred_region
      %30 = dma.done [#allocation3], 1280
    $region17: #{tpu_custom_call.1} parent=1 // pred_fallthru
      _
    %v32 = vld [vmem:[%s1] sm:$0xf]
    %v33 = vld [vmem:[%s1 + $0x4] sm:$0xf]
    %v34 = vld [vmem:[%s1 + $0x8] sm:$0xf]
    %v35 = vld [vmem:[%s1 + $0xc] sm:$0xf]
    %v36 = vld [vmem:[#allocation2] sm:$0xff]
    %v37 = vld [vmem:[#allocation2 + $0x8] sm:$0xff]
    %v38 = vld [vmem:[#allocation2 + $0x10] sm:$0xff]
    %v39 = vld [vmem:[#allocation2 + $0x18] sm:$0xff]
    %v40 = vld [vmem:[#allocation2 + $0x20] sm:$0xff]
    %v41 = vld [vmem:[#allocation2 + $0x28] sm:$0xff]
    %v42 = vld [vmem:[#allocation2 + $0x30] sm:$0xff]
    %v43 = vld [vmem:[#allocation2 + $0x38] sm:$0xff]
    %v44 = vld [vmem:[#allocation2 + $0x40] sm:$0x77]
    %v45 = vld [vmem:[#allocation2 + $0x48] sm:$0x77]
    %v50 = vunpack.c.l.b16 %v32
    %v51 = vunpack.c.l.b16 %v33
    %v52 = vunpack.c.l.b16 %v34
    %v53 = vunpack.c.l.b16 %v35
    %v54 = vpack.c.b16 %v51, %v50
    %v55 = vpack.c.b16 %v53, %v52
    %v66 = vunpack.c.l.b16 %v36
    %v67 = vunpack.c.h.b16 %v36
    %v68 = vunpack.c.l.b16 %v37
    %v69 = vunpack.c.h.b16 %v37
    %v70 = vunpack.c.l.b16 %v38
    %v71 = vunpack.c.h.b16 %v38
    %v72 = vunpack.c.l.b16 %v39
    %v73 = vunpack.c.h.b16 %v39
    %v74 = vunpack.c.l.b16 %v40
    %v75 = vunpack.c.h.b16 %v40
    %v76 = vunpack.c.l.b16 %v41
    %v77 = vunpack.c.h.b16 %v41
    %v78 = vunpack.c.l.b16 %v42
    %v79 = vunpack.c.h.b16 %v42
    %v80 = vunpack.c.l.b16 %v43
    %v81 = vunpack.c.h.b16 %v43
    %v82 = vunpack.c.l.b16 %v44
    %v83 = vunpack.c.h.b16 %v44
    %v84 = vunpack.c.l.b16 %v45
    %v85 = vunpack.c.h.b16 %v45
    %v86 = vpack.c.b16 %v70, %v66
    %v87 = vpack.c.b16 %v71, %v67
    %v88 = vpack.c.b16 %v72, %v68
    %v89 = vpack.c.b16 %v73, %v69
    %v90 = vpack.c.b16 %v78, %v74
    %v91 = vpack.c.b16 %v79, %v75
    %v92 = vpack.c.b16 %v80, %v76
    %v93 = vpack.c.b16 %v81, %v77
    %v94 = vpack.c.b16 %v82, %v82
    %v95 = vpack.c.b16 %v83, %v83
    %v96 = vpack.c.b16 %v84, %v84
    %v97 = vpack.c.b16 %v85, %v85
    %vm106 = vcmask 302080
    %v108 = vsel %vm106, %v54, 0
    %v111 = vsel %vm106, %v55, 0
    %vm113 = vcmask 1041408
    %vm114 = vcmask 1042432
    %v115 = vsel %vm113, 4294967295, 65535
    %v116 = vsel %vm114, %v115, 0
    %v118 = vand.u32 %v94, %v116
    %v121 = vand.u32 %v95, %v116
    %v124 = vand.u32 %v96, %v116
    %v127 = vand.u32 %v97, %v116
    %129 = vmatpush.bf16.msra.mxu0 0
    %130 = vmatpush.bf16.msra.mxu0 0
    %131 = vmatpush.bf16.msra.mxu0 0
    %132 = vmatpush.bf16.msra.mxu0 0
    %133 = vmatpush.bf16.msra.mxu0 0
    %134 = vmatpush.bf16.msra.mxu0 %v118
    %135 = vmatpush.bf16.msra.mxu0 %v90
    %136 = vmatpush.bf16.msra.mxu0 %v86
    %137 = vmatmul.bf16.gmra.mxu0 %v108
    %v138 = vpop.f32.mrf.mxu0
    %v139 = vadd.f32 0.0, %v138
    %v140 = vpop.f32.mrf.mxu0
    %v141 = vadd.f32 0.0, %v140
    %142 = vmatmul.bf16.gmra.mxu0 %v111
    %v143 = vpop.f32.mrf.mxu0
    %v144 = vadd.f32 0.0, %v143
    %v145 = vpop.f32.mrf.mxu0
    %v146 = vadd.f32 0.0, %v145
    %147 = vdwg.mxu0
    %148 = vmatpush.bf16.msra.mxu0 0
    %149 = vmatpush.bf16.msra.mxu0 0
    %150 = vmatpush.bf16.msra.mxu0 0
    %151 = vmatpush.bf16.msra.mxu0 0
    %152 = vmatpush.bf16.msra.mxu0 0
    %153 = vmatpush.bf16.msra.mxu0 %v121
    %154 = vmatpush.bf16.msra.mxu0 %v91
    %155 = vmatpush.bf16.msra.mxu0 %v87
    %156 = vmatmul.bf16.gmra.mxu0 %v108
    %v157 = vpop.f32.mrf.mxu0
    %v158 = vadd.f32 0.0, %v157
    %v159 = vpop.f32.mrf.mxu0
    %v160 = vadd.f32 0.0, %v159
    %161 = vmatmul.bf16.gmra.mxu0 %v111
    %v162 = vpop.f32.mrf.mxu0
    %v163 = vadd.f32 0.0, %v162
    %v164 = vpop.f32.mrf.mxu0
    %v165 = vadd.f32 0.0, %v164
    %166 = vdwg.mxu0
    %167 = vmatpush.bf16.msra.mxu0 0
    %168 = vmatpush.bf16.msra.mxu0 0
    %169 = vmatpush.bf16.msra.mxu0 0
    %170 = vmatpush.bf16.msra.mxu0 0
    %171 = vmatpush.bf16.msra.mxu0 0
    %172 = vmatpush.bf16.msra.mxu0 %v124
    %173 = vmatpush.bf16.msra.mxu0 %v92
    %174 = vmatpush.bf16.msra.mxu0 %v88
    %175 = vmatmul.bf16.gmra.mxu0 %v108
    %v176 = vpop.f32.mrf.mxu0
    %v177 = vadd.f32 0.0, %v176
    %v178 = vpop.f32.mrf.mxu0
    %v179 = vadd.f32 0.0, %v178
    %180 = vmatmul.bf16.gmra.mxu0 %v111
    %v181 = vpop.f32.mrf.mxu0
    %v182 = vadd.f32 0.0, %v181
    %v183 = vpop.f32.mrf.mxu0
    %v184 = vadd.f32 0.0, %v183
    %185 = vdwg.mxu0
    %186 = vmatpush.bf16.msra.mxu0 0
    %187 = vmatpush.bf16.msra.mxu0 0
    %188 = vmatpush.bf16.msra.mxu0 0
    %189 = vmatpush.bf16.msra.mxu0 0
    %190 = vmatpush.bf16.msra.mxu0 0
    %191 = vmatpush.bf16.msra.mxu0 %v127
    %192 = vmatpush.bf16.msra.mxu0 %v93
    %193 = vmatpush.bf16.msra.mxu0 %v89
    %194 = vmatmul.bf16.gmra.mxu0 %v108
    %v195 = vpop.f32.mrf.mxu0
    %v196 = vadd.f32 0.0, %v195
    %v197 = vpop.f32.mrf.mxu0
    %v198 = vadd.f32 0.0, %v197
    %199 = vmatmul.bf16.gmra.mxu0 %v111
    %v200 = vpop.f32.mrf.mxu0
    %v201 = vadd.f32 0.0, %v200
    %v202 = vpop.f32.mrf.mxu0
    %v203 = vadd.f32 0.0, %v202
    %204 = vdwg.mxu0
    %v205 = vld [vmem:[%s2] sm:$0xff]
    %v206 = vld [vmem:[%s2 + $0x8] sm:$0xff]
    %v207 = vld [vmem:[%s2 + $0x10] sm:$0xff]
    %v208 = vld [vmem:[%s2 + $0x18] sm:$0xff]
    %v209 = vadd.f32 %v139, %v158
    %210 = vadd.xlane.f32.xlu0 %v209
    %v211 = vpop.xlane.xlu0 %210
    %v212 = vrot.slane %v211, 4
    %v213 = vadd.f32 %v211, %v212
    %v214 = vrot.slane %v213, 2
    %v215 = vadd.f32 %v213, %v214
    %v216 = vrot.slane %v215, 1
    %v217 = vadd.f32 %v215, %v216
    %s218 = vtos %v217
    %v219 = vmul.f32 %v139, %v139
    %v220 = vmul.f32 %v158, %v158
    %v221 = vadd.f32 %v219, %v220
    %222 = vadd.xlane.f32.xlu0 %v221
    %v223 = vpop.xlane.xlu0 %222
    %v224 = vrot.slane %v223, 4
    %v225 = vadd.f32 %v223, %v224
    %v226 = vrot.slane %v225, 2
    %v227 = vadd.f32 %v225, %v226
    %v228 = vrot.slane %v227, 1
    %v229 = vadd.f32 %v227, %v228
    %s230 = vtos %v229
    %s231 = smul.f32 %s218, 0.00048828125
    %s232 = smul.f32 %s230, 0.00048828125
    %s233 = smul.f32 %s231, %s231
    %s234 = ssub.f32 %s232, %s233
    %s235 = smax.f32 %s234, 0.0
    %v236 = vstv %s231
    %v237 = vsub.f32 %v139, %v236
    %v238 = vsub.f32 %v158, %v236
    %s239 = sadd.f32 %s235, 1e-05
    %v240 = vstv %s239
    %v241 = vrsqrt.pop %v240
    %v242 = vmul.f32 %v241, %v240
    %v243 = vmul.f32 %v242, %v241
    %v244 = vmul.f32 0.5, %v243
    %v245 = vsub.f32 1.5, %v244
    %v246 = vmul.f32 %v241, %v245
    %vm247 = vweird.f32 %v240
    %vm248 = vweird.f32 %v241
    %vm249 = vmor %vm247, %vm248
    %v250 = vsel %vm249, %v241, %v246
    %s251 = vtos %v250
    %v252 = vstv %s251
    %v253 = vmul.f32 %v237, %v252
    %v254 = vmul.f32 %v238, %v252
    %256 = vset.pattern.permute.xlu0 0
    %257 = vperm.xlu0 %256, %v205
    %v258 = vpop.permute.xlu0 %257
    %v260 = vmul.f32 %v253, %v258
    %v261 = vmul.f32 %v254, %v258
    %262 = vset.pattern.permute.xlu0 1
    %263 = vperm.xlu0 %262, %v205
    %v264 = vpop.permute.xlu0 %263
    %v266 = vadd.f32 %v260, %v264
    %v267 = vadd.f32 %v261, %v264
    %v268 = vxor.u32 %v266, 2147483648
    %v269 = vxor.u32 %v267, 2147483648
    %v270 = vmul.f32 %v268, 1.442695
    %v271 = vpow.pop %v270
    %v272 = vmul.f32 %v269, 1.442695
    %v273 = vpow.pop %v272
    %v274 = vadd.f32 %v271, 1.0
    %v275 = vadd.f32 %v273, 1.0
    %v276 = vrcp.pop %v274
    %v277 = vmul.f32 %v274, %v276
    %v278 = vsub.f32 1.0, %v277
    %v279 = vmul.f32 %v276, %v278
    %v280 = vadd.f32 %v276, %v279
    %vm281 = vweird.f32 %v274
    %vm282 = vweird.f32 %v276
    %vm283 = vmor %vm281, %vm282
    %v284 = vsel %vm283, %v276, %v280
    %v285 = vand.u32 2147483647, %v274
    %vm286 = vcmp.eq.f32.partialorder %v285, 8.507059e+37
    %v287 = vand.u32 %v274, 2147483648
    %v288 = vor.u32 1.1754944e-38, %v287
    %v289 = vsel %vm286, %v288, %v284
    %v290 = vmul.f32 1.0, %v289
    %v291 = vrcp.pop %v275
    %v292 = vmul.f32 %v275, %v291
    %v293 = vsub.f32 1.0, %v292
    %v294 = vmul.f32 %v291, %v293
    %v295 = vadd.f32 %v291, %v294
    %vm296 = vweird.f32 %v275
    %vm297 = vweird.f32 %v291
    %vm298 = vmor %vm296, %vm297
    %v299 = vsel %vm298, %v291, %v295
    %v300 = vand.u32 2147483647, %v275
    %vm301 = vcmp.eq.f32.partialorder %v300, 8.507059e+37
    %v302 = vand.u32 %v275, 2147483648
    %v303 = vor.u32 1.1754944e-38, %v302
    %v304 = vsel %vm301, %v303, %v299
    %v305 = vmul.f32 1.0, %v304
    %v306 = vmul.f32 %v266, %v290
    %v307 = vmul.f32 %v267, %v305
    %308 = vst [vmem:[#allocation5] sm:$0xff] %v306
    %309 = vst [vmem:[#allocation5 + $0x8] sm:$0xff] %v307
    %v310 = vadd.f32 %v177, %v196
    %311 = vadd.xlane.f32.xlu0 %v310
    %v312 = vpop.xlane.xlu0 %311
    %v313 = vrot.slane %v312, 4
    %v314 = vadd.f32 %v312, %v313
    %v315 = vrot.slane %v314, 2
    %v316 = vadd.f32 %v314, %v315
    %v317 = vrot.slane %v316, 1
    %v318 = vadd.f32 %v316, %v317
    %s319 = vtos %v318
    %v320 = vmul.f32 %v177, %v177
    %v321 = vmul.f32 %v196, %v196
    %v322 = vadd.f32 %v320, %v321
    %323 = vadd.xlane.f32.xlu0 %v322
    %v324 = vpop.xlane.xlu0 %323
    %v325 = vrot.slane %v324, 4
    %v326 = vadd.f32 %v324, %v325
    %v327 = vrot.slane %v326, 2
    %v328 = vadd.f32 %v326, %v327
    %v329 = vrot.slane %v328, 1
    %v330 = vadd.f32 %v328, %v329
    %s331 = vtos %v330
    %s332 = smul.f32 %s319, 0.00048828125
    %s333 = smul.f32 %s331, 0.00048828125
    %s334 = smul.f32 %s332, %s332
    %s335 = ssub.f32 %s333, %s334
    %s336 = smax.f32 %s335, 0.0
    %v337 = vstv %s332
    %v338 = vsub.f32 %v177, %v337
    %v339 = vsub.f32 %v196, %v337
    %s340 = sadd.f32 %s336, 1e-05
    %v341 = vstv %s340
    %v342 = vrsqrt.pop %v341
    %v343 = vmul.f32 %v342, %v341
    %v344 = vmul.f32 %v343, %v342
    %v345 = vmul.f32 0.5, %v344
    %v346 = vsub.f32 1.5, %v345
    %v347 = vmul.f32 %v342, %v346
    %vm348 = vweird.f32 %v341
    %vm349 = vweird.f32 %v342
    %vm350 = vmor %vm348, %vm349
    %v351 = vsel %vm350, %v342, %v347
    %s352 = vtos %v351
    %v353 = vstv %s352
    %v354 = vmul.f32 %v338, %v353
    %v355 = vmul.f32 %v339, %v353
    %v356 = vmul.f32 %v354, %v258
    %v357 = vmul.f32 %v355, %v258
    %v358 = vadd.f32 %v356, %v264
    %v359 = vadd.f32 %v357, %v264
    %v360 = vxor.u32 %v358, 2147483648
    %v361 = vxor.u32 %v359, 2147483648
    %v362 = vmul.f32 %v360, 1.442695
    %v363 = vpow.pop %v362
    %v364 = vmul.f32 %v361, 1.442695
    %v365 = vpow.pop %v364
    %v366 = vadd.f32 %v363, 1.0
    %v367 = vadd.f32 %v365, 1.0
    %v368 = vrcp.pop %v366
    %v369 = vmul.f32 %v366, %v368
    %v370 = vsub.f32 1.0, %v369
    %v371 = vmul.f32 %v368, %v370
    %v372 = vadd.f32 %v368, %v371
    %vm373 = vweird.f32 %v366
    %vm374 = vweird.f32 %v368
    %vm375 = vmor %vm373, %vm374
    %v376 = vsel %vm375, %v368, %v372
    %v377 = vand.u32 2147483647, %v366
    %vm378 = vcmp.eq.f32.partialorder %v377, 8.507059e+37
    %v379 = vand.u32 %v366, 2147483648
    %v380 = vor.u32 1.1754944e-38, %v379
    %v381 = vsel %vm378, %v380, %v376
    %v382 = vmul.f32 1.0, %v381
    %v383 = vrcp.pop %v367
    %v384 = vmul.f32 %v367, %v383
    %v385 = vsub.f32 1.0, %v384
    %v386 = vmul.f32 %v383, %v385
    %v387 = vadd.f32 %v383, %v386
    %vm388 = vweird.f32 %v367
    %vm389 = vweird.f32 %v383
    %vm390 = vmor %vm388, %vm389
    %v391 = vsel %vm390, %v383, %v387
    %v392 = vand.u32 2147483647, %v367
    %vm393 = vcmp.eq.f32.partialorder %v392, 8.507059e+37
    %v394 = vand.u32 %v367, 2147483648
    %v395 = vor.u32 1.1754944e-38, %v394
    %v396 = vsel %vm393, %v395, %v391
    %v397 = vmul.f32 1.0, %v396
    %v398 = vmul.f32 %v358, %v382
    %v399 = vmul.f32 %v359, %v397
    %s400 = scalar_lea.vmem [#allocation5], 64
    %401 = vst [vmem:[%s400] sm:$0xff] %v398
    %402 = vst [vmem:[%s400 + $0x8] sm:$0xff] %v399
    %v403 = vadd.f32 %v141, %v160
    %404 = vadd.xlane.f32.xlu0 %v403
    %v405 = vpop.xlane.xlu0 %404
    %v406 = vrot.slane %v405, 4
    %v407 = vadd.f32 %v405, %v406
    %v408 = vrot.slane %v407, 2
    %v409 = vadd.f32 %v407, %v408
    %v410 = vrot.slane %v409, 1
    %v411 = vadd.f32 %v409, %v410
    %s412 = vtos %v411
    %v413 = vmul.f32 %v141, %v141
    %v414 = vmul.f32 %v160, %v160
    %v415 = vadd.f32 %v413, %v414
    %416 = vadd.xlane.f32.xlu0 %v415
    %v417 = vpop.xlane.xlu0 %416
    %v418 = vrot.slane %v417, 4
    %v419 = vadd.f32 %v417, %v418
    %v420 = vrot.slane %v419, 2
    %v421 = vadd.f32 %v419, %v420
    %v422 = vrot.slane %v421, 1
    %v423 = vadd.f32 %v421, %v422
    %s424 = vtos %v423
    %s425 = smul.f32 %s412, 0.00048828125
    %s426 = smul.f32 %s424, 0.00048828125
    %s427 = smul.f32 %s425, %s425
    %s428 = ssub.f32 %s426, %s427
    %s429 = smax.f32 %s428, 0.0
    %v430 = vstv %s425
    %v431 = vsub.f32 %v141, %v430
    %v432 = vsub.f32 %v160, %v430
    %s433 = sadd.f32 %s429, 1e-05
    %v434 = vstv %s433
    %v435 = vrsqrt.pop %v434
    %v436 = vmul.f32 %v435, %v434
    %v437 = vmul.f32 %v436, %v435
    %v438 = vmul.f32 0.5, %v437
    %v439 = vsub.f32 1.5, %v438
    %v440 = vmul.f32 %v435, %v439
    %vm441 = vweird.f32 %v434
    %vm442 = vweird.f32 %v435
    %vm443 = vmor %vm441, %vm442
    %v444 = vsel %vm443, %v435, %v440
    %s445 = vtos %v444
    %v446 = vstv %s445
    %v447 = vmul.f32 %v431, %v446
    %v448 = vmul.f32 %v432, %v446
    %450 = vset.pattern.permute.xlu0 0
    %451 = vperm.xlu0 %450, %v206
    %v452 = vpop.permute.xlu0 %451
    %v454 = vmul.f32 %v447, %v452
    %v455 = vmul.f32 %v448, %v452
    %456 = vset.pattern.permute.xlu0 1
    %457 = vperm.xlu0 %456, %v206
    %v458 = vpop.permute.xlu0 %457
    %v460 = vadd.f32 %v454, %v458
    %v461 = vadd.f32 %v455, %v458
    %v462 = vxor.u32 %v460, 2147483648
    %v463 = vxor.u32 %v461, 2147483648
    %v464 = vmul.f32 %v462, 1.442695
    %v465 = vpow.pop %v464
    %v466 = vmul.f32 %v463, 1.442695
    %v467 = vpow.pop %v466
    %v468 = vadd.f32 %v465, 1.0
    %v469 = vadd.f32 %v467, 1.0
    %v470 = vrcp.pop %v468
    %v471 = vmul.f32 %v468, %v470
    %v472 = vsub.f32 1.0, %v471
    %v473 = vmul.f32 %v470, %v472
    %v474 = vadd.f32 %v470, %v473
    %vm475 = vweird.f32 %v468
    %vm476 = vweird.f32 %v470
    %vm477 = vmor %vm475, %vm476
    %v478 = vsel %vm477, %v470, %v474
    %v479 = vand.u32 2147483647, %v468
    %vm480 = vcmp.eq.f32.partialorder %v479, 8.507059e+37
    %v481 = vand.u32 %v468, 2147483648
    %v482 = vor.u32 1.1754944e-38, %v481
    %v483 = vsel %vm480, %v482, %v478
    %v484 = vmul.f32 1.0, %v483
    %v485 = vrcp.pop %v469
    %v486 = vmul.f32 %v469, %v485
    %v487 = vsub.f32 1.0, %v486
    %v488 = vmul.f32 %v485, %v487
    %v489 = vadd.f32 %v485, %v488
    %vm490 = vweird.f32 %v469
    %vm491 = vweird.f32 %v485
    %vm492 = vmor %vm490, %vm491
    %v493 = vsel %vm492, %v485, %v489
    %v494 = vand.u32 2147483647, %v469
    %vm495 = vcmp.eq.f32.partialorder %v494, 8.507059e+37
    %v496 = vand.u32 %v469, 2147483648
    %v497 = vor.u32 1.1754944e-38, %v496
    %v498 = vsel %vm495, %v497, %v493
    %v499 = vmul.f32 1.0, %v498
    %v500 = vmul.f32 %v460, %v484
    %v501 = vmul.f32 %v461, %v499
    %502 = vst [vmem:[#allocation5 + $0x10] sm:$0xff] %v500
    %503 = vst [vmem:[#allocation5 + $0x18] sm:$0xff] %v501
    %v504 = vadd.f32 %v179, %v198
    %505 = vadd.xlane.f32.xlu0 %v504
    %v506 = vpop.xlane.xlu0 %505
    %v507 = vrot.slane %v506, 4
    %v508 = vadd.f32 %v506, %v507
    %v509 = vrot.slane %v508, 2
    %v510 = vadd.f32 %v508, %v509
    %v511 = vrot.slane %v510, 1
    %v512 = vadd.f32 %v510, %v511
    %s513 = vtos %v512
    %v514 = vmul.f32 %v179, %v179
    %v515 = vmul.f32 %v198, %v198
    %v516 = vadd.f32 %v514, %v515
    %517 = vadd.xlane.f32.xlu0 %v516
    %v518 = vpop.xlane.xlu0 %517
    %v519 = vrot.slane %v518, 4
    %v520 = vadd.f32 %v518, %v519
    %v521 = vrot.slane %v520, 2
    %v522 = vadd.f32 %v520, %v521
    %v523 = vrot.slane %v522, 1
    %v524 = vadd.f32 %v522, %v523
    %s525 = vtos %v524
    %s526 = smul.f32 %s513, 0.00048828125
    %s527 = smul.f32 %s525, 0.00048828125
    %s528 = smul.f32 %s526, %s526
    %s529 = ssub.f32 %s527, %s528
    %s530 = smax.f32 %s529, 0.0
    %v531 = vstv %s526
    %v532 = vsub.f32 %v179, %v531
    %v533 = vsub.f32 %v198, %v531
    %s534 = sadd.f32 %s530, 1e-05
    %v535 = vstv %s534
    %v536 = vrsqrt.pop %v535
    %v537 = vmul.f32 %v536, %v535
    %v538 = vmul.f32 %v537, %v536
    %v539 = vmul.f32 0.5, %v538
    %v540 = vsub.f32 1.5, %v539
    %v541 = vmul.f32 %v536, %v540
    %vm542 = vweird.f32 %v535
    %vm543 = vweird.f32 %v536
    %vm544 = vmor %vm542, %vm543
    %v545 = vsel %vm544, %v536, %v541
    %s546 = vtos %v545
    %v547 = vstv %s546
    %v548 = vmul.f32 %v532, %v547
    %v549 = vmul.f32 %v533, %v547
    %v550 = vmul.f32 %v548, %v452
    %v551 = vmul.f32 %v549, %v452
    %v552 = vadd.f32 %v550, %v458
    %v553 = vadd.f32 %v551, %v458
    %v554 = vxor.u32 %v552, 2147483648
    %v555 = vxor.u32 %v553, 2147483648
    %v556 = vmul.f32 %v554, 1.442695
    %v557 = vpow.pop %v556
    %v558 = vmul.f32 %v555, 1.442695
    %v559 = vpow.pop %v558
    %v560 = vadd.f32 %v557, 1.0
    %v561 = vadd.f32 %v559, 1.0
    %v562 = vrcp.pop %v560
    %v563 = vmul.f32 %v560, %v562
    %v564 = vsub.f32 1.0, %v563
    %v565 = vmul.f32 %v562, %v564
    %v566 = vadd.f32 %v562, %v565
    %vm567 = vweird.f32 %v560
    %vm568 = vweird.f32 %v562
    %vm569 = vmor %vm567, %vm568
    %v570 = vsel %vm569, %v562, %v566
    %v571 = vand.u32 2147483647, %v560
    %vm572 = vcmp.eq.f32.partialorder %v571, 8.507059e+37
    %v573 = vand.u32 %v560, 2147483648
    %v574 = vor.u32 1.1754944e-38, %v573
    %v575 = vsel %vm572, %v574, %v570
    %v576 = vmul.f32 1.0, %v575
    %v577 = vrcp.pop %v561
    %v578 = vmul.f32 %v561, %v577
    %v579 = vsub.f32 1.0, %v578
    %v580 = vmul.f32 %v577, %v579
    %v581 = vadd.f32 %v577, %v580
    %vm582 = vweird.f32 %v561
    %vm583 = vweird.f32 %v577
    %vm584 = vmor %vm582, %vm583
    %v585 = vsel %vm584, %v577, %v581
    %v586 = vand.u32 2147483647, %v561
    %vm587 = vcmp.eq.f32.partialorder %v586, 8.507059e+37
    %v588 = vand.u32 %v561, 2147483648
    %v589 = vor.u32 1.1754944e-38, %v588
    %v590 = vsel %vm587, %v589, %v585
    %v591 = vmul.f32 1.0, %v590
    %v592 = vmul.f32 %v552, %v576
    %v593 = vmul.f32 %v553, %v591
    %594 = vst [vmem:[%s400 + $0x10] sm:$0xff] %v592
    %595 = vst [vmem:[%s400 + $0x18] sm:$0xff] %v593
    %v596 = vadd.f32 %v144, %v163
    %597 = vadd.xlane.f32.xlu0 %v596
    %v598 = vpop.xlane.xlu0 %597
    %v599 = vrot.slane %v598, 4
    %v600 = vadd.f32 %v598, %v599
    %v601 = vrot.slane %v600, 2
    %v602 = vadd.f32 %v600, %v601
    %v603 = vrot.slane %v602, 1
    %v604 = vadd.f32 %v602, %v603
    %s605 = vtos %v604
    %v606 = vmul.f32 %v144, %v144
    %v607 = vmul.f32 %v163, %v163
    %v608 = vadd.f32 %v606, %v607
    %609 = vadd.xlane.f32.xlu0 %v608
    %v610 = vpop.xlane.xlu0 %609
    %v611 = vrot.slane %v610, 4
    %v612 = vadd.f32 %v610, %v611
    %v613 = vrot.slane %v612, 2
    %v614 = vadd.f32 %v612, %v613
    %v615 = vrot.slane %v614, 1
    %v616 = vadd.f32 %v614, %v615
    %s617 = vtos %v616
    %s618 = smul.f32 %s605, 0.00048828125
    %s619 = smul.f32 %s617, 0.00048828125
    %s620 = smul.f32 %s618, %s618
    %s621 = ssub.f32 %s619, %s620
    %s622 = smax.f32 %s621, 0.0
    %v623 = vstv %s618
    %v624 = vsub.f32 %v144, %v623
    %v625 = vsub.f32 %v163, %v623
    %s626 = sadd.f32 %s622, 1e-05
    %v627 = vstv %s626
    %v628 = vrsqrt.pop %v627
    %v629 = vmul.f32 %v628, %v627
    %v630 = vmul.f32 %v629, %v628
    %v631 = vmul.f32 0.5, %v630
    %v632 = vsub.f32 1.5, %v631
    %v633 = vmul.f32 %v628, %v632
    %vm634 = vweird.f32 %v627
    %vm635 = vweird.f32 %v628
    %vm636 = vmor %vm634, %vm635
    %v637 = vsel %vm636, %v628, %v633
    %s638 = vtos %v637
    %v639 = vstv %s638
    %v640 = vmul.f32 %v624, %v639
    %v641 = vmul.f32 %v625, %v639
    %643 = vset.pattern.permute.xlu0 0
    %644 = vperm.xlu0 %643, %v207
    %v645 = vpop.permute.xlu0 %644
    %v647 = vmul.f32 %v640, %v645
    %v648 = vmul.f32 %v641, %v645
    %649 = vset.pattern.permute.xlu0 1
    %650 = vperm.xlu0 %649, %v207
    %v651 = vpop.permute.xlu0 %650
    %v653 = vadd.f32 %v647, %v651
    %v654 = vadd.f32 %v648, %v651
    %v655 = vxor.u32 %v653, 2147483648
    %v656 = vxor.u32 %v654, 2147483648
    %v657 = vmul.f32 %v655, 1.442695
    %v658 = vpow.pop %v657
    %v659 = vmul.f32 %v656, 1.442695
    %v660 = vpow.pop %v659
    %v661 = vadd.f32 %v658, 1.0
    %v662 = vadd.f32 %v660, 1.0
    %v663 = vrcp.pop %v661
    %v664 = vmul.f32 %v661, %v663
    %v665 = vsub.f32 1.0, %v664
    %v666 = vmul.f32 %v663, %v665
    %v667 = vadd.f32 %v663, %v666
    %vm668 = vweird.f32 %v661
    %vm669 = vweird.f32 %v663
    %vm670 = vmor %vm668, %vm669
    %v671 = vsel %vm670, %v663, %v667
    %v672 = vand.u32 2147483647, %v661
    %vm673 = vcmp.eq.f32.partialorder %v672, 8.507059e+37
    %v674 = vand.u32 %v661, 2147483648
    %v675 = vor.u32 1.1754944e-38, %v674
    %v676 = vsel %vm673, %v675, %v671
    %v677 = vmul.f32 1.0, %v676
    %v678 = vrcp.pop %v662
    %v679 = vmul.f32 %v662, %v678
    %v680 = vsub.f32 1.0, %v679
    %v681 = vmul.f32 %v678, %v680
    %v682 = vadd.f32 %v678, %v681
    %vm683 = vweird.f32 %v662
    %vm684 = vweird.f32 %v678
    %vm685 = vmor %vm683, %vm684
    %v686 = vsel %vm685, %v678, %v682
    %v687 = vand.u32 2147483647, %v662
    %vm688 = vcmp.eq.f32.partialorder %v687, 8.507059e+37
    %v689 = vand.u32 %v662, 2147483648
    %v690 = vor.u32 1.1754944e-38, %v689
    %v691 = vsel %vm688, %v690, %v686
    %v692 = vmul.f32 1.0, %v691
    %v693 = vmul.f32 %v653, %v677
    %v694 = vmul.f32 %v654, %v692
    %695 = vst [vmem:[#allocation5 + $0x20] sm:$0xff] %v693
    %696 = vst [vmem:[#allocation5 + $0x28] sm:$0xff] %v694
    %v697 = vadd.f32 %v182, %v201
    %698 = vadd.xlane.f32.xlu0 %v697
    %v699 = vpop.xlane.xlu0 %698
    %v700 = vrot.slane %v699, 4
    %v701 = vadd.f32 %v699, %v700
    %v702 = vrot.slane %v701, 2
    %v703 = vadd.f32 %v701, %v702
    %v704 = vrot.slane %v703, 1
    %v705 = vadd.f32 %v703, %v704
    %s706 = vtos %v705
    %v707 = vmul.f32 %v182, %v182
    %v708 = vmul.f32 %v201, %v201
    %v709 = vadd.f32 %v707, %v708
    %710 = vadd.xlane.f32.xlu0 %v709
    %v711 = vpop.xlane.xlu0 %710
    %v712 = vrot.slane %v711, 4
    %v713 = vadd.f32 %v711, %v712
    %v714 = vrot.slane %v713, 2
    %v715 = vadd.f32 %v713, %v714
    %v716 = vrot.slane %v715, 1
    %v717 = vadd.f32 %v715, %v716
    %s718 = vtos %v717
    %s719 = smul.f32 %s706, 0.00048828125
    %s720 = smul.f32 %s718, 0.00048828125
    %s721 = smul.f32 %s719, %s719
    %s722 = ssub.f32 %s720, %s721
    %s723 = smax.f32 %s722, 0.0
    %v724 = vstv %s719
    %v725 = vsub.f32 %v182, %v724
    %v726 = vsub.f32 %v201, %v724
    %s727 = sadd.f32 %s723, 1e-05
    %v728 = vstv %s727
    %v729 = vrsqrt.pop %v728
    %v730 = vmul.f32 %v729, %v728
    %v731 = vmul.f32 %v730, %v729
    %v732 = vmul.f32 0.5, %v731
    %v733 = vsub.f32 1.5, %v732
    %v734 = vmul.f32 %v729, %v733
    %vm735 = vweird.f32 %v728
    %vm736 = vweird.f32 %v729
    %vm737 = vmor %vm735, %vm736
    %v738 = vsel %vm737, %v729, %v734
    %s739 = vtos %v738
    %v740 = vstv %s739
    %v741 = vmul.f32 %v725, %v740
    %v742 = vmul.f32 %v726, %v740
    %v743 = vmul.f32 %v741, %v645
    %v744 = vmul.f32 %v742, %v645
    %v745 = vadd.f32 %v743, %v651
    %v746 = vadd.f32 %v744, %v651
    %v747 = vxor.u32 %v745, 2147483648
    %v748 = vxor.u32 %v746, 2147483648
    %v749 = vmul.f32 %v747, 1.442695
    %v750 = vpow.pop %v749
    %v751 = vmul.f32 %v748, 1.442695
    %v752 = vpow.pop %v751
    %v753 = vadd.f32 %v750, 1.0
    %v754 = vadd.f32 %v752, 1.0
    %v755 = vrcp.pop %v753
    %v756 = vmul.f32 %v753, %v755
    %v757 = vsub.f32 1.0, %v756
    %v758 = vmul.f32 %v755, %v757
    %v759 = vadd.f32 %v755, %v758
    %vm760 = vweird.f32 %v753
    %vm761 = vweird.f32 %v755
    %vm762 = vmor %vm760, %vm761
    %v763 = vsel %vm762, %v755, %v759
    %v764 = vand.u32 2147483647, %v753
    %vm765 = vcmp.eq.f32.partialorder %v764, 8.507059e+37
    %v766 = vand.u32 %v753, 2147483648
    %v767 = vor.u32 1.1754944e-38, %v766
    %v768 = vsel %vm765, %v767, %v763
    %v769 = vmul.f32 1.0, %v768
    %v770 = vrcp.pop %v754
    %v771 = vmul.f32 %v754, %v770
    %v772 = vsub.f32 1.0, %v771
    %v773 = vmul.f32 %v770, %v772
    %v774 = vadd.f32 %v770, %v773
    %vm775 = vweird.f32 %v754
    %vm776 = vweird.f32 %v770
    %vm777 = vmor %vm775, %vm776
    %v778 = vsel %vm777, %v770, %v774
    %v779 = vand.u32 2147483647, %v754
    %vm780 = vcmp.eq.f32.partialorder %v779, 8.507059e+37
    %v781 = vand.u32 %v754, 2147483648
    %v782 = vor.u32 1.1754944e-38, %v781
    %v783 = vsel %vm780, %v782, %v778
    %v784 = vmul.f32 1.0, %v783
    %v785 = vmul.f32 %v745, %v769
    %v786 = vmul.f32 %v746, %v784
    %787 = vst [vmem:[%s400 + $0x20] sm:$0xff] %v785
    %788 = vst [vmem:[%s400 + $0x28] sm:$0xff] %v786
    %v789 = vadd.f32 %v146, %v165
    %790 = vadd.xlane.f32.xlu0 %v789
    %v791 = vpop.xlane.xlu0 %790
    %v792 = vrot.slane %v791, 4
    %v793 = vadd.f32 %v791, %v792
    %v794 = vrot.slane %v793, 2
    %v795 = vadd.f32 %v793, %v794
    %v796 = vrot.slane %v795, 1
    %v797 = vadd.f32 %v795, %v796
    %s798 = vtos %v797
    %v799 = vmul.f32 %v146, %v146
    %v800 = vmul.f32 %v165, %v165
    %v801 = vadd.f32 %v799, %v800
    %802 = vadd.xlane.f32.xlu0 %v801
    %v803 = vpop.xlane.xlu0 %802
    %v804 = vrot.slane %v803, 4
    %v805 = vadd.f32 %v803, %v804
    %v806 = vrot.slane %v805, 2
    %v807 = vadd.f32 %v805, %v806
    %v808 = vrot.slane %v807, 1
    %v809 = vadd.f32 %v807, %v808
    %s810 = vtos %v809
    %s811 = smul.f32 %s798, 0.00048828125
    %s812 = smul.f32 %s810, 0.00048828125
    %s813 = smul.f32 %s811, %s811
    %s814 = ssub.f32 %s812, %s813
    %s815 = smax.f32 %s814, 0.0
    %v816 = vstv %s811
    %v817 = vsub.f32 %v146, %v816
    %v818 = vsub.f32 %v165, %v816
    %s819 = sadd.f32 %s815, 1e-05
    %v820 = vstv %s819
    %v821 = vrsqrt.pop %v820
    %v822 = vmul.f32 %v821, %v820
    %v823 = vmul.f32 %v822, %v821
    %v824 = vmul.f32 0.5, %v823
    %v825 = vsub.f32 1.5, %v824
    %v826 = vmul.f32 %v821, %v825
    %vm827 = vweird.f32 %v820
    %vm828 = vweird.f32 %v821
    %vm829 = vmor %vm827, %vm828
    %v830 = vsel %vm829, %v821, %v826
    %s831 = vtos %v830
    %v832 = vstv %s831
    %v833 = vmul.f32 %v817, %v832
    %v834 = vmul.f32 %v818, %v832
    %836 = vset.pattern.permute.xlu0 0
    %837 = vperm.xlu0 %836, %v208
    %v838 = vpop.permute.xlu0 %837
    %v840 = vmul.f32 %v833, %v838
    %v841 = vmul.f32 %v834, %v838
    %842 = vset.pattern.permute.xlu0 1
    %843 = vperm.xlu0 %842, %v208
    %v844 = vpop.permute.xlu0 %843
    %v846 = vadd.f32 %v840, %v844
    %v847 = vadd.f32 %v841, %v844
    %v848 = vxor.u32 %v846, 2147483648
    %v849 = vxor.u32 %v847, 2147483648
    %v850 = vmul.f32 %v848, 1.442695
    %v851 = vpow.pop %v850
    %v852 = vmul.f32 %v849, 1.442695
    %v853 = vpow.pop %v852
    %v854 = vadd.f32 %v851, 1.0
    %v855 = vadd.f32 %v853, 1.0
    %v856 = vrcp.pop %v854
    %v857 = vmul.f32 %v854, %v856
    %v858 = vsub.f32 1.0, %v857
    %v859 = vmul.f32 %v856, %v858
    %v860 = vadd.f32 %v856, %v859
    %vm861 = vweird.f32 %v854
    %vm862 = vweird.f32 %v856
    %vm863 = vmor %vm861, %vm862
    %v864 = vsel %vm863, %v856, %v860
    %v865 = vand.u32 2147483647, %v854
    %vm866 = vcmp.eq.f32.partialorder %v865, 8.507059e+37
    %v867 = vand.u32 %v854, 2147483648
    %v868 = vor.u32 1.1754944e-38, %v867
    %v869 = vsel %vm866, %v868, %v864
    %v870 = vmul.f32 1.0, %v869
    %v871 = vrcp.pop %v855
    %v872 = vmul.f32 %v855, %v871
    %v873 = vsub.f32 1.0, %v872
    %v874 = vmul.f32 %v871, %v873
    %v875 = vadd.f32 %v871, %v874
    %vm876 = vweird.f32 %v855
    %vm877 = vweird.f32 %v871
    %vm878 = vmor %vm876, %vm877
    %v879 = vsel %vm878, %v871, %v875
    %v880 = vand.u32 2147483647, %v855
    %vm881 = vcmp.eq.f32.partialorder %v880, 8.507059e+37
    %v882 = vand.u32 %v855, 2147483648
    %v883 = vor.u32 1.1754944e-38, %v882
    %v884 = vsel %vm881, %v883, %v879
    %v885 = vmul.f32 1.0, %v884
    %v886 = vmul.f32 %v846, %v870
    %v887 = vmul.f32 %v847, %v885
    %888 = vst [vmem:[#allocation5 + $0x30] sm:$0xff] %v886
    %889 = vst [vmem:[#allocation5 + $0x38] sm:$0xff] %v887
    %v890 = vadd.f32 %v184, %v203
    %891 = vadd.xlane.f32.xlu0 %v890
    %v892 = vpop.xlane.xlu0 %891
    %v893 = vrot.slane %v892, 4
    %v894 = vadd.f32 %v892, %v893
    %v895 = vrot.slane %v894, 2
    %v896 = vadd.f32 %v894, %v895
    %v897 = vrot.slane %v896, 1
    %v898 = vadd.f32 %v896, %v897
    %s899 = vtos %v898
    %v900 = vmul.f32 %v184, %v184
    %v901 = vmul.f32 %v203, %v203
    %v902 = vadd.f32 %v900, %v901
    %903 = vadd.xlane.f32.xlu0 %v902
    %v904 = vpop.xlane.xlu0 %903
    %v905 = vrot.slane %v904, 4
    %v906 = vadd.f32 %v904, %v905
    %v907 = vrot.slane %v906, 2
    %v908 = vadd.f32 %v906, %v907
    %v909 = vrot.slane %v908, 1
    %v910 = vadd.f32 %v908, %v909
    %s911 = vtos %v910
    %s912 = smul.f32 %s899, 0.00048828125
    %s913 = smul.f32 %s911, 0.00048828125
    %s914 = smul.f32 %s912, %s912
    %s915 = ssub.f32 %s913, %s914
    %s916 = smax.f32 %s915, 0.0
    %v917 = vstv %s912
    %v918 = vsub.f32 %v184, %v917
    %v919 = vsub.f32 %v203, %v917
    %s920 = sadd.f32 %s916, 1e-05
    %v921 = vstv %s920
    %v922 = vrsqrt.pop %v921
    %v923 = vmul.f32 %v922, %v921
    %v924 = vmul.f32 %v923, %v922
    %v925 = vmul.f32 0.5, %v924
    %v926 = vsub.f32 1.5, %v925
    %v927 = vmul.f32 %v922, %v926
    %vm928 = vweird.f32 %v921
    %vm929 = vweird.f32 %v922
    %vm930 = vmor %vm928, %vm929
    %v931 = vsel %vm930, %v922, %v927
    %s932 = vtos %v931
    %v933 = vstv %s932
    %v934 = vmul.f32 %v918, %v933
    %v935 = vmul.f32 %v919, %v933
    %v936 = vmul.f32 %v934, %v838
    %v937 = vmul.f32 %v935, %v838
    %v938 = vadd.f32 %v936, %v844
    %v939 = vadd.f32 %v937, %v844
    %v940 = vxor.u32 %v938, 2147483648
    %v941 = vxor.u32 %v939, 2147483648
    %v942 = vmul.f32 %v940, 1.442695
    %v943 = vpow.pop %v942
    %v944 = vmul.f32 %v941, 1.442695
    %v945 = vpow.pop %v944
    %v946 = vadd.f32 %v943, 1.0
    %v947 = vadd.f32 %v945, 1.0
    %v948 = vrcp.pop %v946
    %v949 = vmul.f32 %v946, %v948
    %v950 = vsub.f32 1.0, %v949
    %v951 = vmul.f32 %v948, %v950
    %v952 = vadd.f32 %v948, %v951
    %vm953 = vweird.f32 %v946
    %vm954 = vweird.f32 %v948
    %vm955 = vmor %vm953, %vm954
    %v956 = vsel %vm955, %v948, %v952
    %v957 = vand.u32 2147483647, %v946
    %vm958 = vcmp.eq.f32.partialorder %v957, 8.507059e+37
    %v959 = vand.u32 %v946, 2147483648
    %v960 = vor.u32 1.1754944e-38, %v959
    %v961 = vsel %vm958, %v960, %v956
    %v962 = vmul.f32 1.0, %v961
    %v963 = vrcp.pop %v947
    %v964 = vmul.f32 %v947, %v963
    %v965 = vsub.f32 1.0, %v964
    %v966 = vmul.f32 %v963, %v965
    %v967 = vadd.f32 %v963, %v966
    %vm968 = vweird.f32 %v947
    %vm969 = vweird.f32 %v963
    %vm970 = vmor %vm968, %vm969
    %v971 = vsel %vm970, %v963, %v967
    %v972 = vand.u32 2147483647, %v947
    %vm973 = vcmp.eq.f32.partialorder %v972, 8.507059e+37
    %v974 = vand.u32 %v947, 2147483648
    %v975 = vor.u32 1.1754944e-38, %v974
    %v976 = vsel %vm973, %v975, %v971
    %v977 = vmul.f32 1.0, %v976
    %v978 = vmul.f32 %v938, %v962
    %v979 = vmul.f32 %v939, %v977
    %980 = vst [vmem:[%s400 + $0x30] sm:$0xff] %v978
    %981 = vst [vmem:[%s400 + $0x38] sm:$0xff] %v979
    // Predicated region
    $region18: #{tpu_custom_call.1} parent=1 // pred_check
      _
    $region19: #{tpu_custom_call.1} parent=1 // pred_check_branch
      %983 = sbr.rel (0) target = $region21
    $region20: #{tpu_custom_call.1} parent=1 // pred_region
      %985 = vsyncadd [#allocation4], 0
      %s986 = sshll.u32 [#allocation5], 4
      %s987 = int_to_ptr.vmem [resolvable:$true] %s986
      %s988 = sshll.u32 %s3, 4
      %s989 = int_to_ptr.hbm [resolvable:$true] %s988
      %994 = dma.vmem_to_hbm [thread:$0]  %s987, 2048, %s989, [#allocation4], 256, 256, 16
    $region21: #{tpu_custom_call.1} parent=1 // pred_fallthru
      _
    // Predicated region
    $region22: #{tpu_custom_call.1} parent=1 // pred_check
      _
    $region23: #{tpu_custom_call.1} parent=1 // pred_check_branch
      %996 = sbr.rel (0) target = $region25
    $region24: #{tpu_custom_call.1} parent=1 // pred_region
      %998 = dma.done [#allocation4], 2048
    $region25: #{tpu_custom_call.1} parent=1 // pred_fallthru
      _
    %999 = vsyncpa [#allocation3], 1
    %1000 = vsyncpa [#allocation4], 1

</llo_original>
